<compile_context>
chip_gen: v7x
topology: tpu7x:2x2x1
jax: 0.10.0
libtpu: 0.0.40
codegen_flags: <defaults>
</compile_context>

<pallas_src>
from math import factorial, sqrt

import numpy as np
import jax
import jax.numpy as jnp
from jax.experimental import pallas as pl
from jax.experimental.pallas import tpu as pltpu


# ---------------------------------------------------------------------------
# Wigner 3j symbols in the e3nn real-spherical-harmonics convention (numpy glue)
# ---------------------------------------------------------------------------
def _su2_cg(idx1, idx2, idx3):
    j1, m1 = idx1
    j2, m2 = idx2
    j3, m3 = idx3
    if m3 != m1 + m2:
        return 0.0
    vmin = int(max(-j1 + j2 + m3, -j1 + m1, 0))
    vmax = int(min(j2 + j3 + m1, j3 - j1 + j2, j3 + m3))

    def f(n):
        return float(factorial(round(n)))

    C = sqrt(
        (2.0 * j3 + 1.0)
        * f(j3 + j1 - j2) * f(j3 - j1 + j2) * f(j1 + j2 - j3)
        * f(j3 + m3) * f(j3 - m3)
        / (f(j1 + j2 + j3 + 1) * f(j1 - m1) * f(j1 + m1) * f(j2 - m2) * f(j2 + m2))
    )
    S = 0.0
    for v in range(vmin, vmax + 1):
        S += (-1.0) ** (v + j2 + m2) * f(j2 + j3 + m1 - v) * f(j1 - m1 + v) / (
            f(v) * f(j3 - j1 + j2 - v) * f(j3 + m3 - v) * f(v + j1 - j2 - m3)
        )
    return C * S


def _change_basis_real_to_complex(l):
    q = np.zeros((2 * l + 1, 2 * l + 1), dtype=np.complex128)
    for m in range(-l, 0):
        q[l + m, l + abs(m)] = 1.0 / np.sqrt(2.0)
        q[l + m, l - abs(m)] = -1j / np.sqrt(2.0)
    q[l, l] = 1.0
    for m in range(1, l + 1):
        q[l + m, l + abs(m)] = (-1.0) ** m / np.sqrt(2.0)
        q[l + m, l - abs(m)] = 1j * (-1.0) ** m / np.sqrt(2.0)
    return (-1j) ** l * q


def wigner_3j(l1, l2, l3):
    C = np.zeros((2 * l1 + 1, 2 * l2 + 1, 2 * l3 + 1), dtype=np.float64)
    for m1 in range(-l1, l1 + 1):
        for m2 in range(-l2, l2 + 1):
            m3 = m1 + m2
            if abs(m3) <= l3:
                C[l1 + m1, l2 + m2, l3 + m3] = _su2_cg((l1, m1), (l2, m2), (l3, m3))
    Q1 = _change_basis_real_to_complex(l1)
    Q2 = _change_basis_real_to_complex(l2)
    Q3 = _change_basis_real_to_complex(l3)
    Cr = np.einsum("ij,kl,mn,ikn->jlm", Q1, Q2, np.conj(Q3.T), C.astype(np.complex128))
    assert np.abs(Cr.imag).max() < 1e-8
    Cr = Cr.real
    return Cr / np.linalg.norm(Cr)


# ---------------------------------------------------------------------------
# Irreps helpers  (irreps are lists of (mul, l, parity) with parity in {+1,-1})
# ---------------------------------------------------------------------------
def irreps_dim(irreps):
    return sum(mul * (2 * l + 1) for mul, l, _ in irreps)


def irreps_slices(irreps):
    out, off = [], 0
    for mul, l, _ in irreps:
        d = mul * (2 * l + 1)
        out.append(slice(off, off + d))
        off += d
    return out


def fc_instructions(irreps_in1, irreps_in2, irreps_out):
    instr = []
    for i1, (m1, l1, p1) in enumerate(irreps_in1):
        for i2, (m2, l2, p2) in enumerate(irreps_in2):
            for io, (mo, lo, po) in enumerate(irreps_out):
                if abs(l1 - l2) <= lo <= l1 + l2 and po == p1 * p2:
                    instr.append((i1, i2, io))
    return instr


def build_params(key, irreps_in1, irreps_in2, irreps_out):
    """Deterministic parameter setup (host-side glue): folds per-path weights +
    Wigner 3j into W_big[D2, D1, D_OUT] and a dense bias vector [D_OUT] (numpy f64)."""
    D1, D2, DOUT = irreps_dim(irreps_in1), irreps_dim(irreps_in2), irreps_dim(irreps_out)
    s1, s2, so = irreps_slices(irreps_in1), irreps_slices(irreps_in2), irreps_slices(irreps_out)
    instr = fc_instructions(irreps_in1, irreps_in2, irreps_out)
    n_paths_to = {io: sum(1 for i in instr if i[2] == io) for io in range(len(irreps_out))}

    w_big = np.zeros((D2, D1, DOUT), dtype=np.float64)
    for (i1, i2, io) in instr:
        m1, l1, _ = irreps_in1[i1]
        m2, l2, _ = irreps_in2[i2]
        mo, lo, _ = irreps_out[io]
        key, sub = jax.random.split(key)
        # kaiming_uniform-style deterministic init over total fan-in of this output irrep
        fan_in = m1 * m2 * n_paths_to[io]
        bound = sqrt(3.0 / fan_in)
        w_uvw = np.asarray(
            jax.random.uniform(sub, (m1, m2, mo), minval=-bound, maxval=bound), np.float64
        )
        # UnnormalisedFullyConnectedTensorProduct path coefficient == sqrt(2*l_out + 1)
        coeff = sqrt(2.0 * lo + 1.0)
        w3j = wigner_3j(l1, l2, lo)
        block = coeff * np.einsum("uvw,ijk->vjuiwk", w_uvw, w3j)
        block = block.reshape(m2 * (2 * l2 + 1), m1 * (2 * l1 + 1), mo * (2 * lo + 1))
        w_big[s2[i2], s1[i1], so[io]] += block

    # biases on scalar (l == 0) output irreps.  The PyTorch module initialises
    # them to zero; small deterministic non-zero values are used here so the
    # in-kernel bias-add path is actually exercised.
    bias_dense = np.zeros((DOUT,), dtype=np.float64)
    for (mo, lo, _), sl in zip(irreps_out, so):
        if lo == 0:
            key, sub = jax.random.split(key)
            bias_dense[sl] = np.asarray(
                jax.random.uniform(sub, (mo,), minval=-0.1, maxval=0.1), np.float64
            )

    return w_big, bias_dense


def fold_for_kernel(w_big, bias_dense):
    """Host-side fold: zero-pad D1 to a multiple of 8 (aligned sublane slices in
    the kernel) and flatten to W_flatT[DOUT, D2*D1P]; bias as a (DOUT, 1) column."""
    D2, D1, DOUT = w_big.shape
    d1p = ((D1 + 7) // 8) * 8
    w_pad = np.zeros((D2, d1p, DOUT), np.float64)
    w_pad[:, :D1, :] = w_big
    w_flat_t = w_pad.reshape(D2 * d1p, DOUT).T          # (DOUT, D2*D1P)
    bias_col = bias_dense[:, None]                      # (DOUT, 1)
    return jnp.asarray(w_flat_t, jnp.float32), jnp.asarray(bias_col, jnp.float32), d1p


# ---------------------------------------------------------------------------
# Pallas kernel (feature-major layout):
#   kron[b*D1P + a, z] = x2T[b, z] * x1T[a, z]        (VMEM scratch, aligned stores)
#   outT = W_flatT @ kron + bias                       (single MXU matmul, lane-dense out)
# ---------------------------------------------------------------------------
def tp_kernel(x1t_ref, x2t_ref, w_ref, b_ref, o_ref, kron_ref):
    x1t = x1t_ref[...]                    # (D1P, TN)
    x2t = x2t_ref[...]                    # (D2,  TN)
    d1p = x1t_ref.shape[0]
    d2 = x2t_ref.shape[0]
    # Assemble Kronecker rows in VMEM scratch.  D1P is a multiple of 8, so every
    # static sublane slice below is tile-aligned (plain dense stores, no masks).
    for b in range(d2):                   # small static loop over the in2 dim
        kron_ref[b * d1p:(b + 1) * d1p, :] = x2t[b:b + 1, :] * x1t
    # One MXU contraction: (DOUT, D2*D1P) @ (D2*D1P, TN) -> (DOUT, TN).
    # Output last dim == TN (multiple of 128) -> unmasked, lane-dense stores.
    o_ref[...] = (
        jnp.dot(w_ref[...], kron_ref[...], preferred_element_type=jnp.float32)
        + b_ref[...]                      # (DOUT, 1) broadcast across the batch lanes
    )


def o3_tensor_product(x1, x2, w_flat_t, bias_col, d1p, *, tn=512):
    """x1: (N, D1), x2: (N, D2) or None (-> ones, irreps_in2 = '1x0e'); returns (N, DOUT)."""
    assert tn % 128 == 0, "batch tile must be lane-aligned (multiple of 128)"
    if x2 is None:
        x2 = jnp.ones((x1.shape[0], 1), x1.dtype)

    N, d1 = x1.shape
    d2 = x2.shape[1]
    dout = w_flat_t.shape[0]
    assert w_flat_t.shape[1] == d2 * d1p

    # Pad batch to a multiple of tn (padded rows are zeros -> harmless, sliced off
    # below) and pad x1 features to the 8-aligned D1P used when folding W.
    n_pad = tn * pl.cdiv(N, tn)
    x1p = jnp.pad(x1, ((0, n_pad - N), (0, d1p - d1)))
    x2p = jnp.pad(x2, ((0, n_pad - N), (0, 0)))

    # Feature-major (D, N) layout: lane-dense input DMAs and output stores.
    # (In production SEGNN, choose this layout upstream to avoid the transposes.)
    x1t = x1p.T                                           # (D1P, Npad)
    x2t = x2p.T                                           # (D2,  Npad)

    out_t = pl.pallas_call(
        tp_kernel,
        out_shape=jax.ShapeDtypeStruct((dout, n_pad), jnp.float32),
        grid_spec=pltpu.PrefetchScalarGridSpec(
            num_scalar_prefetch=0,
            grid=(n_pad // tn,),
            in_specs=[
                pl.BlockSpec((d1p, tn), lambda i: (0, i)),
                pl.BlockSpec((d2, tn), lambda i: (0, i)),
                # grid-invariant W / bias; at multi-MB sizes consider
                # pipeline_mode=pl.Buffered(1) to single-buffer them (v7x VMEM).
                pl.BlockSpec((dout, d2 * d1p), lambda i: (0, 0)),
                pl.BlockSpec((dout, 1), lambda i: (0, 0)),
            ],
            out_specs=pl.BlockSpec((dout, tn), lambda i: (0, i)),
            scratch_shapes=[pltpu.VMEM((d2 * d1p, tn), jnp.float32)],
        ),
        compiler_params=pltpu.CompilerParams(dimension_semantics=("parallel",)),
    )(x1t, x2t, w_flat_t, bias_col)

    return out_t.T[:N]


# ---------------------------------------------------------------------------
if __name__ == "__main__":
    # irreps_in1 = "8x0e + 4x1o", irreps_in2 = "1x0e + 1x1o", irreps_out = "8x0e + 4x1o"
    irreps_in1 = [(8, 0, 1), (4, 1, -1)]
    irreps_in2 = [(1, 0, 1), (1, 1, -1)]
    irreps_out = [(8, 0, 1), (4, 1, -1)]

    N = 1000  # not a multiple of the tile -> exercises the padded-tail path
    key = jax.random.PRNGKey(0)
    kp, k1, k2 = jax.random.split(key, 3)

    w_big, bias_dense = build_params(kp, irreps_in1, irreps_in2, irreps_out)
    w_flat_t, bias_col, d1p = fold_for_kernel(w_big, bias_dense)

    D1, D2 = irreps_dim(irreps_in1), irreps_dim(irreps_in2)
    x1 = jax.random.normal(k1, (N, D1), jnp.float32)
    x2 = jax.random.normal(k2, (N, D2), jnp.float32)
    # (if data_in2 is None, the PyTorch module substitutes ones of shape (N, 1);
    #  the wrapper supports x2=None the same way — here the provided branch is tested)

    # tn=256 keeps >= 2 "parallel" grid steps at this small N (v7x dual-TC);
    # for production node counts raise tn towards 512-2048.
    out = o3_tensor_product(x1, x2, w_flat_t, bias_col, d1p, tn=256)
    out = jax.block_until_ready(out)

    # pure-numpy float64 reference of the same folded tensor product
    ref = np.einsum(
        "za,zb,bak->zk",
        np.asarray(x1, np.float64),
        np.asarray(x2, np.float64),
        w_big,
    ) + bias_dense[None, :]
    np.testing.assert_allclose(np.asarray(out), ref, rtol=2e-2, atol=2e-2)

    print("KERNEL_OK")
</pallas_src>

<mosaic_0001>
module attributes {stable_mosaic.version = 11 : i64} {
  func.func @tp_kernel(%arg0: i32, %arg1: memref<24x256xf32, #tpu.memory_space<vmem>>, %arg2: memref<4x256xf32, #tpu.memory_space<vmem>>, %arg3: memref<20x96xf32, #tpu.memory_space<vmem>>, %arg4: memref<20x1xf32, #tpu.memory_space<vmem>>, %arg5: memref<20x256xf32, #tpu.memory_space<vmem>>, %arg6: memref<96x256xf32, #tpu.memory_space<vmem>>) attributes {dimension_semantics = [#tpu.dimension_semantics<parallel>], iteration_bounds = array<i64: 4>, scalar_prefetch = 0 : i64, scratch_operands = 1 : i64, tpu.core_type = #tpu.core_type<tc>, window_params = [{transform_indices = @transform_0, window_bounds = array<i64: 24, 256>}, {transform_indices = @transform_1, window_bounds = array<i64: 4, 256>}, {pipeline_mode = #tpu.pipeline_mode<synchronous>, transform_indices = @transform_2, window_bounds = array<i64: 20, 96>}, {pipeline_mode = #tpu.pipeline_mode<synchronous>, transform_indices = @transform_3, window_bounds = array<i64: 20, 1>}, {transform_indices = @transform_4, window_bounds = array<i64: 20, 256>}]} {
    %c0 = arith.constant 0 : index
    %c0_0 = arith.constant 0 : index
    %0 = vector.load %arg1[%c0, %c0_0] : memref<24x256xf32, #tpu.memory_space<vmem>>, vector<24x256xf32>
    %c0_1 = arith.constant 0 : index
    %c0_2 = arith.constant 0 : index
    %1 = vector.load %arg2[%c0_1, %c0_2] : memref<4x256xf32, #tpu.memory_space<vmem>>, vector<4x256xf32>
    %2 = vector.extract_strided_slice %1 {offsets = [0, 0], sizes = [1, 256], strides = [1, 1]} : vector<4x256xf32> to vector<1x256xf32>
    %3 = vector.broadcast %2 : vector<1x256xf32> to vector<24x256xf32>
    %4 = arith.mulf %3, %0 : vector<24x256xf32>
    %c0_3 = arith.constant 0 : index
    %c0_4 = arith.constant 0 : index
    %5 = vector.load %arg6[%c0_3, %c0_4] : memref<96x256xf32, #tpu.memory_space<vmem>>, vector<24x256xf32>
    tpu.vector_store %arg6[%c0_3, %c0_4], %4 {strides = array<i32>} : memref<96x256xf32, #tpu.memory_space<vmem>>, vector<24x256xf32>,
    %6 = vector.extract_strided_slice %1 {offsets = [1, 0], sizes = [1, 256], strides = [1, 1]} : vector<4x256xf32> to vector<1x256xf32>
    %7 = vector.broadcast %6 : vector<1x256xf32> to vector<24x256xf32>
    %8 = arith.mulf %7, %0 : vector<24x256xf32>
    %c24 = arith.constant 24 : index
    %c0_5 = arith.constant 0 : index
    %9 = vector.load %arg6[%c24, %c0_5] : memref<96x256xf32, #tpu.memory_space<vmem>>, vector<24x256xf32>
    tpu.vector_store %arg6[%c24, %c0_5], %8 {strides = array<i32>} : memref<96x256xf32, #tpu.memory_space<vmem>>, vector<24x256xf32>,
    %10 = vector.extract_strided_slice %1 {offsets = [2, 0], sizes = [1, 256], strides = [1, 1]} : vector<4x256xf32> to vector<1x256xf32>
    %11 = vector.broadcast %10 : vector<1x256xf32> to vector<24x256xf32>
    %12 = arith.mulf %11, %0 : vector<24x256xf32>
    %c48 = arith.constant 48 : index
    %c0_6 = arith.constant 0 : index
    %13 = vector.load %arg6[%c48, %c0_6] : memref<96x256xf32, #tpu.memory_space<vmem>>, vector<24x256xf32>
    tpu.vector_store %arg6[%c48, %c0_6], %12 {strides = array<i32>} : memref<96x256xf32, #tpu.memory_space<vmem>>, vector<24x256xf32>,
    %14 = vector.extract_strided_slice %1 {offsets = [3, 0], sizes = [1, 256], strides = [1, 1]} : vector<4x256xf32> to vector<1x256xf32>
    %15 = vector.broadcast %14 : vector<1x256xf32> to vector<24x256xf32>
    %16 = arith.mulf %15, %0 : vector<24x256xf32>
    %c72 = arith.constant 72 : index
    %c0_7 = arith.constant 0 : index
    %17 = vector.load %arg6[%c72, %c0_7] : memref<96x256xf32, #tpu.memory_space<vmem>>, vector<24x256xf32>
    tpu.vector_store %arg6[%c72, %c0_7], %16 {strides = array<i32>} : memref<96x256xf32, #tpu.memory_space<vmem>>, vector<24x256xf32>,
    %c0_8 = arith.constant 0 : index
    %c0_9 = arith.constant 0 : index
    %18 = vector.load %arg3[%c0_8, %c0_9] : memref<20x96xf32, #tpu.memory_space<vmem>>, vector<20x96xf32>
    %c0_10 = arith.constant 0 : index
    %c0_11 = arith.constant 0 : index
    %19 = vector.load %arg6[%c0_10, %c0_11] : memref<96x256xf32, #tpu.memory_space<vmem>>, vector<96x256xf32>
    %cst = arith.constant dense<0.000000e+00> : vector<20x256xf32>
    %20 = tpu.matmul %18, %19, %cst {dimension_numbers = #tpu.dot_dimension_numbers<[1], [0], [0], [1], [0, 0, 1, 1], [], []>} : vector<20x96xf32>, vector<96x256xf32>, vector<20x256xf32> -> vector<20x256xf32>
    %c0_12 = arith.constant 0 : index
    %c0_13 = arith.constant 0 : index
    %21 = vector.load %arg4[%c0_12, %c0_13] : memref<20x1xf32, #tpu.memory_space<vmem>>, vector<20x1xf32>
    %22 = vector.broadcast %21 : vector<20x1xf32> to vector<20x256xf32>
    %23 = arith.addf %20, %22 : vector<20x256xf32>
    %c0_14 = arith.constant 0 : index
    %c0_15 = arith.constant 0 : index
    %24 = vector.load %arg5[%c0_14, %c0_15] : memref<20x256xf32, #tpu.memory_space<vmem>>, vector<20x256xf32>
    tpu.vector_store %arg5[%c0_14, %c0_15], %23 {strides = array<i32>} : memref<20x256xf32, #tpu.memory_space<vmem>>, vector<20x256xf32>,
    return
  }
  func.func @transform_0(%arg0: i32) -> (i32, i32) {
    %c0_i32 = arith.constant 0 : i32
    %c0_i32_0 = arith.constant 0 : i32
    return %c0_i32, %arg0 : i32, i32
  }
  func.func @transform_1(%arg0: i32) -> (i32, i32) {
    %c0_i32 = arith.constant 0 : i32
    %c0_i32_0 = arith.constant 0 : i32
    return %c0_i32, %arg0 : i32, i32
  }
  func.func @transform_2(%arg0: i32) -> (i32, i32) {
    %c0_i32 = arith.constant 0 : i32
    %c0_i32_0 = arith.constant 0 : i32
    %c0_i32_1 = arith.constant 0 : i32
    return %c0_i32, %c0_i32_0 : i32, i32
  }
  func.func @transform_3(%arg0: i32) -> (i32, i32) {
    %c0_i32 = arith.constant 0 : i32
    %c0_i32_0 = arith.constant 0 : i32
    %c0_i32_1 = arith.constant 0 : i32
    return %c0_i32, %c0_i32_0 : i32, i32
  }
  func.func @transform_4(%arg0: i32) -> (i32, i32) {
    %c0_i32 = arith.constant 0 : i32
    %c0_i32_0 = arith.constant 0 : i32
    return %c0_i32, %arg0 : i32, i32
  }
}

</mosaic_0001>

<llo_original>
// kernel: tpu_custom_call.1
$region0: #{tpu_custom_call.1}
  #allocation0 [shape = 'u32[]', space=smem, size = 0x4, offset = 0x4, fixed_abs, tag = 'smem constant byte address 0x4 - core index']
  #allocation1 [shape = 'u32[144,128]{1,0:T(1,128)}', space=vmem, size = 0x12000, scoped, tag = 'internal scratch']
  #allocation2 [shape = 'f32[96,256]{1,0:T(8,128)}', space=vmem, size = 0x18000, scoped, tag = 'scratch operand']
  %s0 = inlined_call_operand.hbm [shape: f32[24,1024], index: 0, kind: input, shape index: {}]
  %s1 = inlined_call_operand.hbm [shape: f32[4,1024], index: 1, kind: input, shape index: {}]
  %s2 = inlined_call_operand.vmem [shape: f32[20,96], index: 2, kind: input, shape index: {}]
  %s3 = inlined_call_operand.vmem [shape: f32[20,1], index: 3, kind: input, shape index: {}]
  %s4 = inlined_call_operand.hbm [shape: f32[20,1024], index: 4, kind: output, shape index: {}]
  %s5 = sld [smem:[#allocation0]]
  $region57: #{tpu_custom_call.1} parent=0
    _
  %s7 = ssub.s32 1, %s5
  %s8 = scalar_select 0, %s7, %s5
  $region1: #{tpu_custom_call.1} parent=0
    #allocation3 [shape = 'u8[49152]{0}', space=vmem, size = 0xc000, scoped, tag = 'input window, operand 0']
    #allocation4 [shape = 's32[2]{0}', space=sflag, size = 0x8, scoped, tag = 'scoped memory for tpu_custom_call.1']
    #allocation5 [shape = 's32[2]{0}', space=sflag, size = 0x8, scoped, tag = 'scoped memory for tpu_custom_call.1']
    #allocation6 [shape = 'u8[8192]{0}', space=vmem, size = 0x2000, scoped, tag = 'input window, operand 1']
    #allocation7 [shape = 's32[2]{0}', space=sflag, size = 0x8, scoped, tag = 'scoped memory for tpu_custom_call.1']
    #allocation8 [shape = 'u8[49152]{0}', space=vmem, size = 0xc000, scoped, tag = 'output window, operand 0']
    %9 = vsyncpa [#allocation4], 0
    %s10 = scalar_lea.sflag [#allocation4], 1
    %11 = vsyncpa %s10, 0
    %12 = vsyncpa [#allocation7], 0
    %s13 = scalar_lea.sflag [#allocation7], 1
    %14 = vsyncpa %s13, 0
    %15 = vsyncpa [#allocation5], 0
    %s16 = scalar_lea.sflag [#allocation5], 1
    %17 = vsyncpa %s16, 0
    loop: start=0, step=1, limit=6
    $region2: #{tpu_custom_call.1} parent=1 // loop_pre_header
      _
    $region3: #{tpu_custom_call.1} parent=1 // loop_header
      %s19 = sphi 0, %s23
      %p20 = scmp.ge.s32.totalorder %s19, 6
      %s29 = sphi 0, %s31
      %s32 = sphi 0, %s29
      %s33 = sphi 0, %s32
      %s49 = sphi 0, %s33
      %s55 = sphi 0, %s57
      %s58 = sphi 0, %s55
      %s59 = sphi 0, %s58
      %s75 = sphi 0, %s59
      %s79 = sphi 0, %s79
      %s81 = sphi 0, %s79
      %s82 = sphi 0, %s81
      %s96 = sphi 0, %s82
      %s100 = sphi 0, %s100
      %s102 = sphi 0, %s100
      %s103 = sphi 0, %s102
      %s117 = sphi 0, %s103
      %s123 = sphi 0, %s125
      %s126 = sphi 0, %s123
      %s127 = sphi 0, %s126
      %s143 = sphi 0, %s127
    $region4: #{tpu_custom_call.1} parent=1 // loop_header_branch
      %22 = sbr.rel (%p20) target = $region8
    $region5: #{tpu_custom_call.1} parent=1 // loop_body
      %s24 = ssub.s32 %s19, 1
      %s25 = ssub.s32 %s19, 2
      %s26 = sadd.s32 %s19, 1
      %s27 = ssub.s32 %s19, %s26
      %p28 = scmp.eq.s32.totalorder %s27, 0
      %s30 = sadd.s32 %s29, 1
      %s31 = scalar_select %p28, %s29, %s30
      %p34 = pneg %p28
      %p35 = scmp.eq.s32.totalorder %s19, 3
      %p36 = por %p34, %p35
      %p37 = scmp.ne.s32.totalorder %s29, %s32
      %p38 = scmp.eq.s32.totalorder %s19, 0
      %p39 = por %p37, %p38
      %p40 = scmp.ne.s32.totalorder %s29, %s32
      %p41 = scmp.eq.s32.totalorder %s24, 3
      %p42 = por %p40, %p41
      %p43 = scmp.ne.s32.totalorder %s32, %s33
      %p44 = scmp.eq.s32.totalorder %s24, 0
      %p45 = por %p43, %p44
      %p46 = scmp.ne.s32.totalorder %s32, %s33
      %p47 = scmp.eq.s32.totalorder %s25, 3
      %p48 = por %p46, %p47
      %p50 = scmp.ne.s32.totalorder %s33, %s49
      %p51 = scmp.eq.s32.totalorder %s25, 0
      %p52 = por %p50, %p51
      %s53 = ssub.s32 %s19, %s26
      %p54 = scmp.eq.s32.totalorder %s53, 0
      %s56 = sadd.s32 %s55, 1
      %s57 = scalar_select %p54, %s55, %s56
      %p60 = pneg %p54
      %p61 = scmp.eq.s32.totalorder %s19, 3
      %p62 = por %p60, %p61
      %p63 = scmp.ne.s32.totalorder %s55, %s58
      %p64 = scmp.eq.s32.totalorder %s19, 0
      %p65 = por %p63, %p64
      %p66 = scmp.ne.s32.totalorder %s55, %s58
      %p67 = scmp.eq.s32.totalorder %s24, 3
      %p68 = por %p66, %p67
      %p69 = scmp.ne.s32.totalorder %s58, %s59
      %p70 = scmp.eq.s32.totalorder %s24, 0
      %p71 = por %p69, %p70
      %p72 = scmp.ne.s32.totalorder %s58, %s59
      %p73 = scmp.eq.s32.totalorder %s25, 3
      %p74 = por %p72, %p73
      %p76 = scmp.ne.s32.totalorder %s59, %s75
      %p77 = scmp.eq.s32.totalorder %s25, 0
      %p78 = por %p76, %p77
      %s80 = sadd.s32 %s79, 1
      %p83 = scmp.eq.s32.totalorder %s19, 3
      %p84 = scmp.ne.s32.totalorder %s79, %s81
      %p85 = scmp.eq.s32.totalorder %s19, 0
      %p86 = por %p84, %p85
      %p87 = scmp.ne.s32.totalorder %s79, %s81
      %p88 = scmp.eq.s32.totalorder %s24, 3
      %p89 = por %p87, %p88
      %p90 = scmp.ne.s32.totalorder %s81, %s82
      %p91 = scmp.eq.s32.totalorder %s24, 0
      %p92 = por %p90, %p91
      %p93 = scmp.ne.s32.totalorder %s81, %s82
      %p94 = scmp.eq.s32.totalorder %s25, 3
      %p95 = por %p93, %p94
      %p97 = scmp.ne.s32.totalorder %s82, %s96
      %p98 = scmp.eq.s32.totalorder %s25, 0
      %p99 = por %p97, %p98
      %s101 = sadd.s32 %s100, 1
      %p104 = scmp.eq.s32.totalorder %s19, 3
      %p105 = scmp.ne.s32.totalorder %s100, %s102
      %p106 = scmp.eq.s32.totalorder %s19, 0
      %p107 = por %p105, %p106
      %p108 = scmp.ne.s32.totalorder %s100, %s102
      %p109 = scmp.eq.s32.totalorder %s24, 3
      %p110 = por %p108, %p109
      %p111 = scmp.ne.s32.totalorder %s102, %s103
      %p112 = scmp.eq.s32.totalorder %s24, 0
      %p113 = por %p111, %p112
      %p114 = scmp.ne.s32.totalorder %s102, %s103
      %p115 = scmp.eq.s32.totalorder %s25, 3
      %p116 = por %p114, %p115
      %p118 = scmp.ne.s32.totalorder %s103, %s117
      %p119 = scmp.eq.s32.totalorder %s25, 0
      %p120 = por %p118, %p119
      %s121 = ssub.s32 %s19, %s26
      %p122 = scmp.eq.s32.totalorder %s121, 0
      %s124 = sadd.s32 %s123, 1
      %s125 = scalar_select %p122, %s123, %s124
      %p128 = pneg %p122
      %p129 = scmp.eq.s32.totalorder %s19, 3
      %p130 = por %p128, %p129
      %p131 = scmp.ne.s32.totalorder %s123, %s126
      %p132 = scmp.eq.s32.totalorder %s19, 0
      %p133 = por %p131, %p132
      %p134 = scmp.ne.s32.totalorder %s123, %s126
      %p135 = scmp.eq.s32.totalorder %s24, 3
      %p136 = por %p134, %p135
      %p137 = scmp.ne.s32.totalorder %s126, %s127
      %p138 = scmp.eq.s32.totalorder %s24, 0
      %p139 = por %p137, %p138
      %p140 = scmp.ne.s32.totalorder %s126, %s127
      %p141 = scmp.eq.s32.totalorder %s25, 3
      %p142 = por %p140, %p141
      %p144 = scmp.ne.s32.totalorder %s127, %s143
      %p145 = scmp.eq.s32.totalorder %s25, 0
      %p146 = por %p144, %p145
      %p147 = scmp.le.s32.totalorder 1, %s19
      %p148 = scmp.lt.s32.totalorder %s19, 5
      %p149 = pnand %p147, %p148
      %p150 = pneg %p149
      // Predicated region
      $region9: #{tpu_custom_call.1} parent=5 // pred_check
        _
      $region10: #{tpu_custom_call.1} parent=5 // pred_check_branch
        %152 = sbr.rel (%p149) target = $region12
      $region11: #{tpu_custom_call.1} parent=5 // pred_region
        %s153 = ssub.s32 %s19, 1
        // Predicated region
        $region13: #{tpu_custom_call.1} parent=11 // pred_check
          %p154 = pneg %p92
        $region14: #{tpu_custom_call.1} parent=11 // pred_check_branch
          %156 = sbr.rel (%p154) target = $region16
        $region15: #{tpu_custom_call.1} parent=11 // pred_region
          _
        $region16: #{tpu_custom_call.1} parent=11 // pred_fallthru
          _
        // Predicated region
        $region17: #{tpu_custom_call.1} parent=11 // pred_check
          %p157 = pneg %p113
        $region18: #{tpu_custom_call.1} parent=11 // pred_check_branch
          %159 = sbr.rel (%p157) target = $region20
        $region19: #{tpu_custom_call.1} parent=11 // pred_region
          _
        $region20: #{tpu_custom_call.1} parent=11 // pred_fallthru
          _
      $region12: #{tpu_custom_call.1} parent=5 // pred_fallthru
        _
      %p160 = scmp.lt.s32.totalorder %s19, 4
      // Predicated region
      $region21: #{tpu_custom_call.1} parent=5 // pred_check
        %p161 = pneg %p160
      $region22: #{tpu_custom_call.1} parent=5 // pred_check_branch
        %163 = sbr.rel (%p161) target = $region24
      $region23: #{tpu_custom_call.1} parent=5 // pred_region
        // Predicated region
        $region25: #{tpu_custom_call.1} parent=23 // pred_check
          %p164 = pneg %p39
        $region26: #{tpu_custom_call.1} parent=23 // pred_check_branch
          %166 = sbr.rel (%p164) target = $region28
        $region27: #{tpu_custom_call.1} parent=23 // pred_region
          %s167 = sand.u32 %s29, 1
          %s168 = scalar_lea.sflag [#allocation4], %s167
          %s169 = sand.u32 %s29, 1
          %s170 = smul.addr %s169, 48
          %s171 = scalar_lea.vmem [#allocation3], %s170
          %s172 = smul.u32 2, %s19
          %s174 = ssub.s32 768, 768
          %175 = vsyncadd %s168, %s174
          %s176 = smul.addr %s172, 128
          %s177 = scalar_lea.hbm %s0, %s176
          %s178 = sshll.u32 %s171, 4
          %s179 = int_to_ptr.vmem [resolvable:$true] %s178
          %184 = dma.hbm_to_vmem [thread:$0]  %s177, 768, %s179, %s168, 1024, 256, 16
        $region28: #{tpu_custom_call.1} parent=23 // pred_fallthru
          _
        // Predicated region
        $region29: #{tpu_custom_call.1} parent=23 // pred_check
          %p185 = pneg %p65
        $region30: #{tpu_custom_call.1} parent=23 // pred_check_branch
          %187 = sbr.rel (%p185) target = $region32
        $region31: #{tpu_custom_call.1} parent=23 // pred_region
          %s188 = sand.u32 %s55, 1
          %s189 = scalar_lea.sflag [#allocation7], %s188
          %s190 = sand.u32 %s55, 1
          %s191 = smul.addr %s190, 8
          %s192 = scalar_lea.vmem [#allocation6], %s191
          %s193 = smul.u32 2, %s19
          %s195 = ssub.s32 128, 128
          %196 = vsyncadd %s189, %s195
          %s197 = smul.addr %s193, 64
          %s198 = scalar_lea.hbm %s1, %s197
          %s200 = sshll.u32 %s192, 4
          %s201 = int_to_ptr.vmem [resolvable:$true] %s200
          %203 = dma.hbm_to_vmem [thread:$0]  %s198, 128, %s201, %s189
        $region32: #{tpu_custom_call.1} parent=23 // pred_fallthru
          _
      $region24: #{tpu_custom_call.1} parent=5 // pred_fallthru
        _
      %p204 = scmp.le.s32.totalorder 1, %s19
      %p205 = scmp.lt.s32.totalorder %s19, 5
      %p206 = pnand %p204, %p205
      %p207 = pneg %p206
      // Predicated region
      $region33: #{tpu_custom_call.1} parent=5 // pred_check
        _
      $region34: #{tpu_custom_call.1} parent=5 // pred_check_branch
        %209 = sbr.rel (%p206) target = $region36
      $region35: #{tpu_custom_call.1} parent=5 // pred_region
        %s210 = ssub.s32 %s19, 1
        %s211 = sand.u32 %s32, 1
        %s212 = scalar_lea.sflag [#allocation4], %s211
        %s213 = sand.u32 %s32, 1
        %s214 = smul.addr %s213, 48
        %s215 = scalar_lea.vmem [#allocation3], %s214
        // Predicated region
        $region37: #{tpu_custom_call.1} parent=35 // pred_check
          %p216 = pneg %p45
        $region38: #{tpu_custom_call.1} parent=35 // pred_check_branch
          %218 = sbr.rel (%p216) target = $region40
        $region39: #{tpu_custom_call.1} parent=35 // pred_region
          %219 = dma.done %s212, 768
        $region40: #{tpu_custom_call.1} parent=35 // pred_fallthru
          _
        %s220 = sand.u32 %s58, 1
        %s221 = scalar_lea.sflag [#allocation7], %s220
        %s222 = sand.u32 %s58, 1
        %s223 = smul.addr %s222, 8
        %s224 = scalar_lea.vmem [#allocation6], %s223
        // Predicated region
        $region41: #{tpu_custom_call.1} parent=35 // pred_check
          %p225 = pneg %p71
        $region42: #{tpu_custom_call.1} parent=35 // pred_check_branch
          %227 = sbr.rel (%p225) target = $region44
        $region43: #{tpu_custom_call.1} parent=35 // pred_region
          %228 = dma.done %s221, 128
        $region44: #{tpu_custom_call.1} parent=35 // pred_fallthru
          _
        %s229 = sand.u32 %s32, 1
        %s230 = scalar_lea.sflag [#allocation4], %s229
        %s231 = sand.u32 %s32, 1
        %s232 = smul.addr %s231, 48
        %s233 = scalar_lea.vmem [#allocation3], %s232
        %p234 = pneg %p45
        %p235 = pneg %p42
        %s236 = sand.u32 %s58, 1
        %s237 = scalar_lea.sflag [#allocation7], %s236
        %s238 = sand.u32 %s58, 1
        %s239 = smul.addr %s238, 8
        %s240 = scalar_lea.vmem [#allocation6], %s239
        %p241 = pneg %p71
        %p242 = pneg %p68
        %p243 = pneg %p92
        %p244 = pneg %p89
        %p245 = pneg %p113
        %p246 = pneg %p110
        %p247 = pneg %p139
        %p248 = pneg %p136
        %s249 = sand.u32 %s126, 1
        %s250 = scalar_lea.sflag [#allocation5], %s249
        %s251 = sand.u32 %s126, 1
        %s252 = smul.addr %s251, 48
        %s253 = scalar_lea.vmem [#allocation8], %s252
        %s254 = smul.u32 2, %s24
        %s255 = smul.u32 2, %s24
        %s256 = smul.u32 2, %s24
        %v257 = vld [vmem:[%s215] sm:$0xff]
        %v258 = vld [vmem:[%s215 + $0x8] sm:$0xff]
        %v259 = vld [vmem:[%s215 + $0x10] sm:$0xff]
        %v260 = vld [vmem:[%s215 + $0x18] sm:$0xff]
        %v261 = vld [vmem:[%s215 + $0x20] sm:$0xff]
        %v262 = vld [vmem:[%s215 + $0x28] sm:$0xff]
        %v263 = vld [vmem:[%s224] sm:$0xff]
        %v265 = vlaneseq
        %v266 = vshrl.u32 %v265, 7
        %v267 = vsub.s32 0, %v266
        %v268 = vrot.slane %v263, %v267
        %v269 = vlaneseq
        %v270 = vshrl.u32 %v269, 7
        %v271 = vsub.s32 4, %v270
        %v272 = vrot.slane %v263, %v271
        %v275 = vlaneseq
        %v276 = vshrl.u32 %v275, 7
        %v277 = vsub.s32 0, %v276
        %v278 = vrot.slane %v268, %v277
        %v279 = vlaneseq
        %v280 = vshrl.u32 %v279, 7
        %v281 = vsub.s32 0, %v280
        %v282 = vrot.slane %v272, %v281
        %v283 = vmul.f32 %v278, %v257
        %v284 = vmul.f32 %v282, %v258
        %v285 = vmul.f32 %v278, %v259
        %v286 = vmul.f32 %v282, %v260
        %v287 = vmul.f32 %v278, %v261
        %v288 = vmul.f32 %v282, %v262
        %289 = vst [vmem:[#allocation2] sm:$0xff] %v283
        %290 = vst [vmem:[#allocation2 + $0x8] sm:$0xff] %v284
        %291 = vst [vmem:[#allocation2 + $0x10] sm:$0xff] %v285
        %292 = vst [vmem:[#allocation2 + $0x18] sm:$0xff] %v286
        %293 = vst [vmem:[#allocation2 + $0x20] sm:$0xff] %v287
        %294 = vst [vmem:[#allocation2 + $0x28] sm:$0xff] %v288
        %v295 = vlaneseq
        %v296 = vshrl.u32 %v295, 7
        %v297 = vsub.s32 1, %v296
        %v298 = vrot.slane %v263, %v297
        %v299 = vlaneseq
        %v300 = vshrl.u32 %v299, 7
        %v301 = vsub.s32 5, %v300
        %v302 = vrot.slane %v263, %v301
        %v305 = vlaneseq
        %v306 = vshrl.u32 %v305, 7
        %v307 = vsub.s32 1, %v306
        %v308 = vrot.slane %v298, %v307
        %v309 = vlaneseq
        %v310 = vshrl.u32 %v309, 7
        %v311 = vsub.s32 1, %v310
        %v312 = vrot.slane %v302, %v311
        %v313 = vmul.f32 %v308, %v257
        %v314 = vmul.f32 %v312, %v258
        %v315 = vmul.f32 %v308, %v259
        %v316 = vmul.f32 %v312, %v260
        %v317 = vmul.f32 %v308, %v261
        %v318 = vmul.f32 %v312, %v262
        %319 = vst [vmem:[#allocation2 + $0x30] sm:$0xff] %v313
        %320 = vst [vmem:[#allocation2 + $0x38] sm:$0xff] %v314
        %321 = vst [vmem:[#allocation2 + $0x40] sm:$0xff] %v315
        %322 = vst [vmem:[#allocation2 + $0x48] sm:$0xff] %v316
        %323 = vst [vmem:[#allocation2 + $0x50] sm:$0xff] %v317
        %324 = vst [vmem:[#allocation2 + $0x58] sm:$0xff] %v318
        %v325 = vlaneseq
        %v326 = vshrl.u32 %v325, 7
        %v327 = vsub.s32 2, %v326
        %v328 = vrot.slane %v263, %v327
        %v329 = vlaneseq
        %v330 = vshrl.u32 %v329, 7
        %v331 = vsub.s32 6, %v330
        %v332 = vrot.slane %v263, %v331
        %v335 = vlaneseq
        %v336 = vshrl.u32 %v335, 7
        %v337 = vsub.s32 2, %v336
        %v338 = vrot.slane %v328, %v337
        %v339 = vlaneseq
        %v340 = vshrl.u32 %v339, 7
        %v341 = vsub.s32 2, %v340
        %v342 = vrot.slane %v332, %v341
        %v343 = vmul.f32 %v338, %v257
        %v344 = vmul.f32 %v342, %v258
        %v345 = vmul.f32 %v338, %v259
        %v346 = vmul.f32 %v342, %v260
        %v347 = vmul.f32 %v338, %v261
        %v348 = vmul.f32 %v342, %v262
        %349 = vst [vmem:[#allocation2 + $0x60] sm:$0xff] %v343
        %350 = vst [vmem:[#allocation2 + $0x68] sm:$0xff] %v344
        %351 = vst [vmem:[#allocation2 + $0x70] sm:$0xff] %v345
        %352 = vst [vmem:[#allocation2 + $0x78] sm:$0xff] %v346
        %353 = vst [vmem:[#allocation2 + $0x80] sm:$0xff] %v347
        %354 = vst [vmem:[#allocation2 + $0x88] sm:$0xff] %v348
        %v355 = vlaneseq
        %v356 = vshrl.u32 %v355, 7
        %v357 = vsub.s32 3, %v356
        %v358 = vrot.slane %v263, %v357
        %v359 = vlaneseq
        %v360 = vshrl.u32 %v359, 7
        %v361 = vsub.s32 7, %v360
        %v362 = vrot.slane %v263, %v361
        %v365 = vlaneseq
        %v366 = vshrl.u32 %v365, 7
        %v367 = vsub.s32 3, %v366
        %v368 = vrot.slane %v358, %v367
        %v369 = vlaneseq
        %v370 = vshrl.u32 %v369, 7
        %v371 = vsub.s32 3, %v370
        %v372 = vrot.slane %v362, %v371
        %v373 = vmul.f32 %v368, %v257
        %v374 = vmul.f32 %v372, %v258
        %v375 = vmul.f32 %v368, %v259
        %v376 = vmul.f32 %v372, %v260
        %v377 = vmul.f32 %v368, %v261
        %v378 = vmul.f32 %v372, %v262
        %379 = vst [vmem:[#allocation2 + $0x90] sm:$0xff] %v373
        %380 = vst [vmem:[#allocation2 + $0x98] sm:$0xff] %v374
        %381 = vst [vmem:[#allocation2 + $0xa0] sm:$0xff] %v375
        %382 = vst [vmem:[#allocation2 + $0xa8] sm:$0xff] %v376
        %383 = vst [vmem:[#allocation2 + $0xb0] sm:$0xff] %v377
        %384 = vst [vmem:[#allocation2 + $0xb8] sm:$0xff] %v378
        %v385 = vld [vmem:[%s2] sm:$0xff]
        %v386 = vld [vmem:[%s2 + $0x8] sm:$0xff]
        %v387 = vld [vmem:[%s2 + $0x10] sm:$0xf]
        %v388 = vld [vmem:[#allocation2] sm:$0xff]
        %v389 = vld [vmem:[#allocation2 + $0x8] sm:$0xff]
        %v390 = vld [vmem:[#allocation2 + $0x10] sm:$0xff]
        %v391 = vld [vmem:[#allocation2 + $0x18] sm:$0xff]
        %v392 = vld [vmem:[#allocation2 + $0x20] sm:$0xff]
        %v393 = vld [vmem:[#allocation2 + $0x28] sm:$0xff]
        %v394 = vld [vmem:[#allocation2 + $0x30] sm:$0xff]
        %v395 = vld [vmem:[#allocation2 + $0x38] sm:$0xff]
        %v396 = vld [vmem:[#allocation2 + $0x40] sm:$0xff]
        %v397 = vld [vmem:[#allocation2 + $0x48] sm:$0xff]
        %v398 = vld [vmem:[#allocation2 + $0x50] sm:$0xff]
        %v399 = vld [vmem:[#allocation2 + $0x58] sm:$0xff]
        %v400 = vld [vmem:[#allocation2 + $0x60] sm:$0xff]
        %v401 = vld [vmem:[#allocation2 + $0x68] sm:$0xff]
        %v402 = vld [vmem:[#allocation2 + $0x70] sm:$0xff]
        %v403 = vld [vmem:[#allocation2 + $0x78] sm:$0xff]
        %v404 = vld [vmem:[#allocation2 + $0x80] sm:$0xff]
        %v405 = vld [vmem:[#allocation2 + $0x88] sm:$0xff]
        %v406 = vld [vmem:[#allocation2 + $0x90] sm:$0xff]
        %v407 = vld [vmem:[#allocation2 + $0x98] sm:$0xff]
        %v408 = vld [vmem:[#allocation2 + $0xa0] sm:$0xff]
        %v409 = vld [vmem:[#allocation2 + $0xa8] sm:$0xff]
        %v410 = vld [vmem:[#allocation2 + $0xb0] sm:$0xff]
        %v411 = vld [vmem:[#allocation2 + $0xb8] sm:$0xff]
        %v412 = vld [vmem:[%s3] sm:$0xff]
        %v413 = vld [vmem:[%s3 + $0x8] sm:$0xff]
        %v414 = vld [vmem:[%s3 + $0x10] sm:$0xf]
        %416 = vset.pattern.permute.xlu0 0
        %417 = vperm.xlu0 %416, %v412
        %v418 = vpop.permute.xlu0 %417
        %421 = vset.pattern.permute.xlu0 0
        %422 = vperm.xlu0 %421, %v413
        %v423 = vpop.permute.xlu0 %422
        %426 = vset.pattern.permute.xlu0 0
        %427 = vperm.xlu0 %426, %v414
        %v428 = vpop.permute.xlu0 %427
        %vm430 = vcmask 785408
        %v432 = vsel %vm430, %v385, 0
        %v435 = vsel %vm430, %v386, 0
        %v438 = vsel %vm430, %v387, 0
        %440 = vmatprep.subr.mxu0 %v389
        %441 = vmatpush1.msra.mxu0 %v388
        %442 = vmatprep.subr.mxu0 %v391
        %443 = vmatpush1.msra.mxu0 %v390
        %444 = vmatprep.subr.mxu0 %v393
        %445 = vmatpush1.msra.mxu0 %v392
        %446 = vmatprep.subr.mxu0 %v395
        %447 = vmatpush1.msra.mxu0 %v394
        %448 = vmatprep.subr.mxu0 %v397
        %449 = vmatpush1.msra.mxu0 %v396
        %450 = vmatprep.subr.mxu0 %v399
        %451 = vmatpush1.msra.mxu0 %v398
        %452 = vmatprep.subr.mxu0 %v401
        %453 = vmatpush1.msra.mxu0 %v400
        %454 = vmatprep.subr.mxu0 %v403
        %455 = vmatpush1.msra.mxu0 %v402
        %456 = vmatprep.subr.mxu0 %v405
        %457 = vmatpush1.msra.mxu0 %v404
        %458 = vmatprep.subr.mxu0 %v407
        %459 = vmatpush1.msra.mxu0 %v406
        %460 = vmatprep.subr.mxu0 %v409
        %461 = vmatpush1.msra.mxu0 %v408
        %462 = vmatprep.subr.mxu0 %v411
        %463 = vmatpush1.msra.mxu0 %v410
        %464 = vmatprep.subr.mxu0 0.0
        %465 = vmatpush1.msra.mxu0 0.0
        %466 = vmatprep.subr.mxu0 0.0
        %467 = vmatpush1.msra.mxu0 0.0
        %468 = vmatprep.subr.mxu0 0.0
        %469 = vmatpush1.msra.mxu0 0.0
        %470 = vmatprep.subr.mxu0 0.0
        %471 = vmatpush1.msra.mxu0 0.0
        %472 = vmatprep.subr.mxu0 0.0
        %473 = vmatpush1.msra.mxu0 0.0
        %474 = vmatprep.subr.mxu0 0.0
        %475 = vmatpush1.msra.mxu0 0.0
        %476 = vmatprep.subr.mxu0 0.0
        %477 = vmatpush1.msra.mxu0 0.0
        %478 = vmatprep.subr.mxu0 0.0
        %479 = vmatpush1.msra.mxu0 0.0
        %480 = vmatprep.subr.mxu0 0.0
        %481 = vmatpush1.msra.mxu0 0.0
        %482 = vmatprep.subr.mxu0 0.0
        %483 = vmatpush1.msra.mxu0 0.0
        %484 = vmatprep.subr.mxu0 0.0
        %485 = vmatpush1.msra.mxu0 0.0
        %486 = vmatprep.subr.mxu0 0.0
        %487 = vmatpush1.msra.mxu0 0.0
        %488 = vmatprep.subr.mxu0 0.0
        %489 = vmatpush1.msra.mxu0 0.0
        %490 = vmatprep.subr.mxu0 0.0
        %491 = vmatpush1.msra.mxu0 0.0
        %492 = vmatprep.subr.mxu0 0.0
        %493 = vmatpush1.msra.mxu0 0.0
        %494 = vmatprep.subr.mxu0 0.0
        %495 = vmatpush1.msra.mxu0 0.0
        %496 = vmatprep.subr.mxu0 0.0
        %497 = vmatpush1.msra.mxu0 0.0
        %498 = vmatprep.subr.mxu0 0.0
        %499 = vmatpush1.msra.mxu0 0.0
        %500 = vmatprep.subr.mxu0 0.0
        %501 = vmatpush1.msra.mxu0 0.0
        %502 = vmatprep.subr.mxu0 0.0
        %503 = vmatpush1.msra.mxu0 0.0
        %504 = vmatprep.mubr.f32.mxu0 0.0
        %505 = vmatmul.mubr.f32.gmra.mrb[0].mxu0 %v432
        %v506 = vpop.f32.mrb[0].mxu0
        %v507 = vadd.f32 %v418, %v506
        %v508 = vpop.f32.mrb[0].mxu0
        %v509 = vadd.f32 %v418, %v508
        %510 = vmatprep.mubr.f32.mxu0 0.0
        %511 = vmatmul.mubr.f32.gmra.mrb[0].mxu0 %v435
        %v512 = vpop.f32.mrb[0].mxu0
        %v513 = vadd.f32 %v423, %v512
        %v514 = vpop.f32.mrb[0].mxu0
        %v515 = vadd.f32 %v423, %v514
        %516 = vmatprep.mubr.f32.mxu0 0.0
        %517 = vmatmul.mubr.f32.gmra.mrb[0].mxu0 %v438
        %v518 = vpop.f32.mrb[0].mxu0
        %v519 = vadd.f32 %v428, %v518
        %v520 = vpop.f32.mrb[0].mxu0
        %v521 = vadd.f32 %v428, %v520
        %522 = vdwg.mxu0
        %523 = vst [vmem:[%s253] sm:$0xff] %v507
        %524 = vst [vmem:[%s253 + $0x8] sm:$0xff] %v509
        %525 = vst [vmem:[%s253 + $0x10] sm:$0xff] %v513
        %526 = vst [vmem:[%s253 + $0x18] sm:$0xff] %v515
        %527 = vst [vmem:[%s253 + $0x20] sm:$0xf] %v519
        %528 = vst [vmem:[%s253 + $0x28] sm:$0xf] %v521
        %s529 = sand.u32 %s126, 1
        %s530 = scalar_lea.sflag [#allocation5], %s529
        %s531 = sand.u32 %s126, 1
        %s532 = smul.addr %s531, 48
        %s533 = scalar_lea.vmem [#allocation8], %s532
        // Predicated region
        $region45: #{tpu_custom_call.1} parent=35 // pred_check
          %p534 = pneg %p136
        $region46: #{tpu_custom_call.1} parent=35 // pred_check_branch
          %536 = sbr.rel (%p534) target = $region48
        $region47: #{tpu_custom_call.1} parent=35 // pred_region
          %s537 = smul.u32 2, %s24
          %s539 = ssub.s32 768, 768
          %540 = vsyncadd %s530, %s539
          %s541 = smul.addr %s537, 128
          %s542 = scalar_lea.hbm %s4, %s541
          %s543 = sshll.u32 %s533, 4
          %s544 = int_to_ptr.vmem [resolvable:$true] %s543
          %549 = dma.vmem_to_hbm [thread:$0]  %s544, 768, %s542, %s530, 256, 1024, 16
        $region48: #{tpu_custom_call.1} parent=35 // pred_fallthru
          _
      $region36: #{tpu_custom_call.1} parent=5 // pred_fallthru
        _
      %p550 = scmp.le.s32.totalorder 2, %s19
      // Predicated region
      $region49: #{tpu_custom_call.1} parent=5 // pred_check
        %p551 = pneg %p550
      $region50: #{tpu_custom_call.1} parent=5 // pred_check_branch
        %553 = sbr.rel (%p551) target = $region52
      $region51: #{tpu_custom_call.1} parent=5 // pred_region
        %s554 = ssub.s32 %s19, 2
        // Predicated region
        $region53: #{tpu_custom_call.1} parent=51 // pred_check
          %p555 = pneg %p142
        $region54: #{tpu_custom_call.1} parent=51 // pred_check_branch
          %557 = sbr.rel (%p555) target = $region56
        $region55: #{tpu_custom_call.1} parent=51 // pred_region
          %s558 = sand.u32 %s127, 1
          %s559 = scalar_lea.sflag [#allocation5], %s558
          %s560 = sand.u32 %s127, 1
          %s561 = smul.addr %s560, 48
          %s562 = scalar_lea.vmem [#allocation8], %s561
          %563 = dma.done %s559, 768
        $region56: #{tpu_custom_call.1} parent=51 // pred_fallthru
          _
      $region52: #{tpu_custom_call.1} parent=5 // pred_fallthru
        _
    $region6: #{tpu_custom_call.1} parent=1 // loop_footer
      %s23 = sadd.s32 1, %s19
    $region7: #{tpu_custom_call.1} parent=1 // loop_footer_branch
      %18 = sbr.rel target = $region3
    $region8: #{tpu_custom_call.1} parent=1 // loop_exit
      _
    %564 = vsyncpa [#allocation4], 1
    %s565 = scalar_lea.sflag [#allocation4], 1
    %566 = vsyncpa %s565, 1
    %567 = vsyncpa [#allocation7], 1
    %s568 = scalar_lea.sflag [#allocation7], 1
    %569 = vsyncpa %s568, 1
    %570 = vsyncpa [#allocation5], 1
    %s571 = scalar_lea.sflag [#allocation5], 1
    %572 = vsyncpa %s571, 1

</llo_original>
